<compile_context>
chip_gen: v6e
topology: v6e:2x2x1
jax: 0.10.0
libtpu: 0.0.40
codegen_flags: <defaults>
</compile_context>

<pallas_src>
import jax
import jax.numpy as jnp
from jax.experimental import pallas as pl
from jax.experimental.pallas import tpu as pltpu


def _normalize_kernel(x_ref, p_ref, o_ref):
    # x_ref: (row_block, col_block); p_ref: (row_block, 2) f32 = [mean, 1/std]
    x = x_ref[...].astype(jnp.float32)
    mean = p_ref[:, 0:1]
    inv_std = p_ref[:, 1:2]
    o_ref[...] = ((x - mean) * inv_std).astype(o_ref.dtype)


def _choose_blocks(rows, cols, itemsize,
                   target_bytes=2 << 20, cap_bytes=4 << 20, max_lanes=2048):
    """Pick (row_block, col_block) for the (rows, cols) slab.

    col_block: full extent if cols <= max_lanes (always legal), otherwise a
    multiple of 128 so stores stay lane-dense except in the last col tile.
    row_block: multiple of 8 sized so a block is ~target_bytes (<= cap_bytes),
    then shrunk if needed so the row ("parallel") axis gets multiple grid
    steps (keeps both v7x TensorCores busy).
    """
    # --- column (lane) block ---
    if cols <= max_lanes:
        col_block = cols                 # full-extent lane dim (always legal)
    else:
        col_block = max_lanes            # multiple of 128; masked tail only in last tile

    # --- row (sublane) block ---
    if rows <= 8:
        row_block = rows                 # full extent (legal even if < 8)
    else:
        unit = col_block * itemsize      # bytes contributed by one block row
        row_block = max(8, (target_bytes // unit) // 8 * 8)
        while row_block > 8 and row_block * unit > cap_bytes:   # safety: stay under cap
            row_block -= 8
        # guarantee a multi-step parallel grid (>= 2, ideally >= 8 row tiles)
        desired_tiles = 8 if rows >= 64 else 2
        max_rb = max(8, ((pl.cdiv(rows, desired_tiles) + 7) // 8) * 8)
        row_block = min(row_block, max_rb)

    return row_block, col_block


def normalize(x, mean, std):
    """x: (N, C, H, W); mean, std: any shape with C elements (e.g. (1,C,1,1)).

    Returns (x - mean) / std with per-channel mean/std, same dtype as x.
    """
    N, C, H, W = x.shape
    rows = N * C
    cols = H * W

    # Lane-dense slab: one row per (n, c) plane, H*W on the lane axis.
    x2 = x.reshape(rows, cols)

    # Per-channel constants in f32; the divide happens once here.
    mean_c = jnp.asarray(mean, jnp.float32).reshape(C)
    inv_std_c = 1.0 / jnp.asarray(std, jnp.float32).reshape(C)
    # Per-row values (row index = n*C + c -> channel = row % C), fused into a
    # single (rows, 2) sidecar: column 0 = mean, column 1 = 1/std.
    params = jnp.stack([jnp.tile(mean_c, N), jnp.tile(inv_std_c, N)], axis=1)

    row_block, col_block = _choose_blocks(rows, cols, x.dtype.itemsize)
    grid = (pl.cdiv(rows, row_block), pl.cdiv(cols, col_block))  # col axis innermost

    out2 = pl.pallas_call(
        _normalize_kernel,
        out_shape=jax.ShapeDtypeStruct((rows, cols), x.dtype),
        grid=grid,
        in_specs=[
            pl.BlockSpec((row_block, col_block), lambda i, j: (i, j)),
            # Block index constant along the inner (col) axis -> Pallas skips
            # re-DMAing this tiny sidecar on inner iterations.
            pl.BlockSpec((row_block, 2), lambda i, j: (i, 0)),
        ],
        out_specs=pl.BlockSpec((row_block, col_block), lambda i, j: (i, j)),
        compiler_params=pltpu.CompilerParams(
            dimension_semantics=("parallel", "arbitrary"),
            # 32 MiB is safe on every generation (v5e default scoped is only
            # 16 MiB; v7x physical VMEM is 64 MiB) and comfortably holds
            # double-buffered <=4 MiB in/out blocks plus the sidecar.
            vmem_limit_bytes=32 * 1024 * 1024,
        ),
        cost_estimate=pl.CostEstimate(
            flops=2 * rows * cols,
            transcendentals=0,
            bytes_accessed=2 * x.size * x.dtype.itemsize,
        ),
    )(x2, params)

    return out2.reshape(N, C, H, W)


if __name__ == "__main__":
    key = jax.random.PRNGKey(0)
    N, C, H, W = 2, 3, 16, 16  # Normalize hard-codes 3 channels

    x = jax.random.normal(key, (N, C, H, W), dtype=jnp.float32)
    # Deterministic "parameters" (ImageNet-style mean/std), shape (1, 3, 1, 1)
    mean = jnp.array([0.485, 0.456, 0.406], dtype=jnp.float32).reshape(1, 3, 1, 1)
    std = jnp.array([0.229, 0.224, 0.225], dtype=jnp.float32).reshape(1, 3, 1, 1)

    out = normalize(x, mean, std)
    jax.block_until_ready(out)

    # Reference check in plain JAX
    ref = (x - mean) / std
    assert out.shape == x.shape and out.dtype == x.dtype
    assert jnp.allclose(out, ref, atol=1e-5, rtol=1e-6)
    print("KERNEL_OK")
</pallas_src>

<mosaic_0001>
module attributes {stable_mosaic.version = 11 : i64} {
  func.func @_normalize_kernel(%arg0: i32, %arg1: i32, %arg2: memref<6x256xf32, #tpu.memory_space<vmem>>, %arg3: memref<6x2xf32, #tpu.memory_space<vmem>>, %arg4: memref<6x256xf32, #tpu.memory_space<vmem>>) attributes {dimension_semantics = [#tpu.dimension_semantics<parallel>, #tpu.dimension_semantics<arbitrary>], iteration_bounds = array<i64: 1, 1>, scalar_prefetch = 0 : i64, scratch_operands = 0 : i64, tpu.core_type = #tpu.core_type<tc>, window_params = [{transform_indices = @transform_0, window_bounds = array<i64: 6, 256>}, {transform_indices = @transform_1, window_bounds = array<i64: 6, 2>}, {transform_indices = @transform_2, window_bounds = array<i64: 6, 256>}]} {
    %c0 = arith.constant 0 : index
    %c0_0 = arith.constant 0 : index
    %0 = vector.load %arg2[%c0, %c0_0] : memref<6x256xf32, #tpu.memory_space<vmem>>, vector<6x256xf32>
    %c0_1 = arith.constant 0 : index
    %c0_2 = arith.constant 0 : index
    %1 = vector.load %arg3[%c0_1, %c0_2] : memref<6x2xf32, #tpu.memory_space<vmem>>, vector<6x1xf32>
    %c0_3 = arith.constant 0 : index
    %c1 = arith.constant 1 : index
    %2 = vector.load %arg3[%c0_3, %c1] : memref<6x2xf32, #tpu.memory_space<vmem>>, vector<6x1xf32>
    %3 = vector.broadcast %1 : vector<6x1xf32> to vector<6x256xf32>
    %4 = arith.subf %0, %3 : vector<6x256xf32>
    %5 = vector.broadcast %2 : vector<6x1xf32> to vector<6x256xf32>
    %6 = arith.mulf %4, %5 : vector<6x256xf32>
    %c0_4 = arith.constant 0 : index
    %c0_5 = arith.constant 0 : index
    %7 = vector.load %arg4[%c0_4, %c0_5] : memref<6x256xf32, #tpu.memory_space<vmem>>, vector<6x256xf32>
    tpu.vector_store %arg4[%c0_4, %c0_5], %6 {strides = array<i32>} : memref<6x256xf32, #tpu.memory_space<vmem>>, vector<6x256xf32>,
    return
  }
  func.func @transform_0(%arg0: i32, %arg1: i32) -> (i32, i32) {
    %c0_i32 = arith.constant 0 : i32
    return %arg0, %arg1 : i32, i32
  }
  func.func @transform_1(%arg0: i32, %arg1: i32) -> (i32, i32) {
    %c0_i32 = arith.constant 0 : i32
    %c0_i32_0 = arith.constant 0 : i32
    return %arg0, %c0_i32 : i32, i32
  }
  func.func @transform_2(%arg0: i32, %arg1: i32) -> (i32, i32) {
    %c0_i32 = arith.constant 0 : i32
    return %arg0, %arg1 : i32, i32
  }
}

</mosaic_0001>

<llo_original>
// kernel: tpu_custom_call.1
$region0: #{tpu_custom_call.1}
  #allocation0 [shape = 'u32[]', space=smem, size = 0x4, offset = 0x4, fixed_abs, tag = 'smem constant byte address 0x4 - core index']
  #allocation1 [shape = 'u32[144,128]{1,0:T(1,128)}', space=vmem, size = 0x12000, scoped, tag = 'internal scratch']
  %s0 = inlined_call_operand.hbm [shape: f32[6,256], index: 0, kind: input, shape index: {}]
  %s1 = inlined_call_operand.vmem [shape: f32[6,2], index: 1, kind: input, shape index: {}]
  %s2 = inlined_call_operand.hbm [shape: f32[6,256], index: 2, kind: output, shape index: {}]
  %s3 = sld [smem:[#allocation0]]
  $region22: #{tpu_custom_call.1} parent=0
    _
  %s5 = ssub.s32 1, %s3
  %s6 = scalar_select 0, %s5, %s3
  $region1: #{tpu_custom_call.1} parent=0
    #allocation2 [shape = 'u8[8192]{0}', space=vmem, size = 0x2000, scoped, tag = 'input window, operand 0, single buffered']
    #allocation3 [shape = 's32[1]{0}', space=sflag, size = 0x4, scoped, tag = 'scoped memory for tpu_custom_call.1']
    #allocation4 [shape = 's32[1]{0}', space=sflag, size = 0x4, scoped, tag = 'scoped memory for tpu_custom_call.1']
    #allocation5 [shape = 'u8[8192]{0}', space=vmem, size = 0x2000, scoped, tag = 'output window, operand 0, single buffered']
    %7 = vsyncpa [#allocation3], 0
    %8 = vsyncpa [#allocation4], 0
    // Predicated region
    $region2: #{tpu_custom_call.1} parent=1 // pred_check
      _
    $region3: #{tpu_custom_call.1} parent=1 // pred_check_branch
      %10 = sbr.rel (0) target = $region5
    $region4: #{tpu_custom_call.1} parent=1 // pred_region
      %s12 = ssub.s32 256, 256
      %13 = vsyncadd [#allocation3], %s12
      %s15 = sshll.u32 [#allocation2], 4
      %s16 = int_to_ptr.vmem [resolvable:$true] %s15
      %18 = dma.hbm_to_vmem [thread:$0]  %s0, 256, %s16, [#allocation3]
    $region5: #{tpu_custom_call.1} parent=1 // pred_fallthru
      _
    // Predicated region
    $region6: #{tpu_custom_call.1} parent=1 // pred_check
      _
    $region7: #{tpu_custom_call.1} parent=1 // pred_check_branch
      %20 = sbr.rel (0) target = $region9
    $region8: #{tpu_custom_call.1} parent=1 // pred_region
      _
    $region9: #{tpu_custom_call.1} parent=1 // pred_fallthru
      _
    // Predicated region
    $region10: #{tpu_custom_call.1} parent=1 // pred_check
      _
    $region11: #{tpu_custom_call.1} parent=1 // pred_check_branch
      %22 = sbr.rel (0) target = $region13
    $region12: #{tpu_custom_call.1} parent=1 // pred_region
      %23 = dma.done [#allocation3], 256
    $region13: #{tpu_custom_call.1} parent=1 // pred_fallthru
      _
    %v24 = vld [vmem:[#allocation2] sm:$0x3f]
    %v25 = vld [vmem:[#allocation2 + $0x8] sm:$0x3f]
    %v26 = vld [vmem:[%s1] sm:$0x3f]
    %28 = vset.pattern.permute.xlu0 0
    %29 = vperm.xlu0 %28, %v26
    %v30 = vpop.permute.xlu0 %29
    %v32 = vsub.f32 %v24, %v30
    %v33 = vsub.f32 %v25, %v30
    %34 = vset.pattern.permute.xlu0 1
    %35 = vperm.xlu0 %34, %v26
    %v36 = vpop.permute.xlu0 %35
    %v38 = vmul.f32 %v32, %v36
    %v39 = vmul.f32 %v33, %v36
    %40 = vst [vmem:[#allocation5] sm:$0x3f] %v38
    %41 = vst [vmem:[#allocation5 + $0x8] sm:$0x3f] %v39
    // Predicated region
    $region14: #{tpu_custom_call.1} parent=1 // pred_check
      _
    $region15: #{tpu_custom_call.1} parent=1 // pred_check_branch
      %43 = sbr.rel (0) target = $region17
    $region16: #{tpu_custom_call.1} parent=1 // pred_region
      %s45 = ssub.s32 256, 256
      %46 = vsyncadd [#allocation4], %s45
      %s48 = sshll.u32 [#allocation5], 4
      %s49 = int_to_ptr.vmem [resolvable:$true] %s48
      %51 = dma.vmem_to_hbm [thread:$0]  %s49, 256, %s2, [#allocation4]
    $region17: #{tpu_custom_call.1} parent=1 // pred_fallthru
      _
    // Predicated region
    $region18: #{tpu_custom_call.1} parent=1 // pred_check
      _
    $region19: #{tpu_custom_call.1} parent=1 // pred_check_branch
      %53 = sbr.rel (0) target = $region21
    $region20: #{tpu_custom_call.1} parent=1 // pred_region
      %54 = dma.done [#allocation4], 256
    $region21: #{tpu_custom_call.1} parent=1 // pred_fallthru
      _
    %55 = vsyncpa [#allocation3], 1
    %56 = vsyncpa [#allocation4], 1

</llo_original>
